<compile_context>
chip_gen: v5e
topology: v5e:2x2
jax: 0.10.0
libtpu: 0.0.40
codegen_flags: <defaults>
</compile_context>

<pallas_src>
import jax
import jax.numpy as jnp
from jax.experimental import pallas as pl
from jax.experimental.pallas import tpu as pltpu


# Flat f32[17] parameter layout (SMEM):
#   [0:4)   w1[0, :]   fc1 weights for input feature 0
#   [4:8)   w1[1, :]   fc1 weights for input feature 1
#   [8:12)  b1
#   [12:16) w2
#   [16]    b2
def mlp_kernel(params_ref, x_ref, o_ref):
    x0 = x_ref[0:1, :]            # (1, TB): input feature 0, batch on lanes
    x1 = x_ref[1:2, :]            # (1, TB): input feature 1
    acc = jnp.zeros_like(x0)      # fc2 accumulator
    for j in range(4):            # unrolled hidden units -> pure VPU math
        h_j = jnp.maximum(
            params_ref[j] * x0 + params_ref[4 + j] * x1 + params_ref[8 + j],
            0.0,
        )
        acc = acc + params_ref[12 + j] * h_j
    y = acc + params_ref[16]
    o_ref[...] = jax.nn.sigmoid(y).astype(o_ref.dtype)   # exp/recip on the EUP


def simple_nn_forward(x, w1, b1, w2, b2, *, tb=2048):
    """x: [B, 2] f32 -> [B, 1] f32.

    w1: [2, 4] (== fc1.weight.T), b1: [4], w2: [4] (== fc2.weight[0]), b2: [1].
    tb: batch tile width on the lane axis (multiple of 128). 2048 amortizes the
    per-grid-step overhead well on v5e/v6e and stays tiny vs v7x's 64 MiB VMEM.
    """
    B = x.shape[0]
    tb = max(128, tb)
    n_tiles = pl.cdiv(B, tb)
    Bp = n_tiles * tb

    params = jnp.concatenate(
        [w1.reshape(-1), b1.reshape(-1), w2.reshape(-1), b2.reshape(-1)]
    ).astype(jnp.float32)                                        # f32[17]
    # Lane-major layout + pad batch up to the tile size (tail lanes are junk
    # but finite; sliced off below).
    xt = jnp.pad(x.T.astype(jnp.float32), ((0, 0), (0, Bp - B)))  # [2, Bp]

    out = pl.pallas_call(
        mlp_kernel,
        out_shape=jax.ShapeDtypeStruct((1, Bp), jnp.float32),
        grid_spec=pltpu.PrefetchScalarGridSpec(
            num_scalar_prefetch=1,                 # params -> SMEM scalars
            grid=(n_tiles,),
            in_specs=[pl.BlockSpec((2, tb), lambda i, params: (0, i))],
            out_specs=pl.BlockSpec((1, tb), lambda i, params: (0, i)),
        ),
        compiler_params=pltpu.CompilerParams(
            dimension_semantics=("parallel",),     # megacore-shardable batch axis
        ),
    )(params, xt)
    return out[0, :B].reshape(B, 1)


def init_params(key):
    """Deterministic init matching nn.Linear shapes: fc1(2->4), fc2(4->1)."""
    k1, k2, k3, k4 = jax.random.split(key, 4)
    lim1 = 1.0 / jnp.sqrt(2.0)
    lim2 = 1.0 / jnp.sqrt(4.0)
    w1 = jax.random.uniform(k1, (2, 4), jnp.float32, -lim1, lim1)  # fc1.weight.T
    b1 = jax.random.uniform(k2, (4,), jnp.float32, -lim1, lim1)    # fc1.bias
    w2 = jax.random.uniform(k3, (4,), jnp.float32, -lim2, lim2)    # fc2.weight[0]
    b2 = jax.random.uniform(k4, (1,), jnp.float32, -lim2, lim2)    # fc2.bias
    return w1, b1, w2, b2


def ref_forward(x, w1, b1, w2, b2):
    h = jnp.maximum(x @ w1 + b1, 0.0)
    return jax.nn.sigmoid(h @ w2.reshape(4, 1) + b2)


if __name__ == "__main__":
    key = jax.random.PRNGKey(0)
    kx, kp = jax.random.split(key)
    B = 8
    x = jax.random.normal(kx, (B, 2), jnp.float32)
    w1, b1, w2, b2 = init_params(kp)

    out = jax.block_until_ready(simple_nn_forward(x, w1, b1, w2, b2))
    ref = ref_forward(x, w1, b1, w2, b2)
    assert out.shape == (B, 1)
    assert jnp.allclose(out, ref, atol=1e-5, rtol=1e-5), "mismatch vs reference (B=8)"

    # Exercise the multi-tile / padded-tail path (grid > 1, non-multiple batch).
    x2 = jax.random.normal(jax.random.PRNGKey(1), (1000, 2), jnp.float32)
    out2 = jax.block_until_ready(simple_nn_forward(x2, w1, b1, w2, b2, tb=512))
    ref2 = ref_forward(x2, w1, b1, w2, b2)
    assert out2.shape == (1000, 1)
    assert jnp.allclose(out2, ref2, atol=1e-5, rtol=1e-5), "mismatch vs reference (B=1000)"

    print("KERNEL_OK")
</pallas_src>

<mosaic_0001>
module attributes {stable_mosaic.version = 11 : i64} {
  func.func @mlp_kernel(%arg0: i32, %arg1: memref<17xf32, #tpu.memory_space<smem>>, %arg2: memref<2x2048xf32, #tpu.memory_space<vmem>>, %arg3: memref<1x2048xf32, #tpu.memory_space<vmem>>) attributes {dimension_semantics = [#tpu.dimension_semantics<parallel>], iteration_bounds = array<i64: 1>, scalar_prefetch = 1 : i64, scratch_operands = 0 : i64, tpu.core_type = #tpu.core_type<tc>, window_params = [{transform_indices = @transform_0, window_bounds = array<i64: 2, 2048>}, {transform_indices = @transform_1, window_bounds = array<i64: 1, 2048>}]} {
    %c0 = arith.constant 0 : index
    %c0_0 = arith.constant 0 : index
    %0 = vector.load %arg2[%c0, %c0_0] : memref<2x2048xf32, #tpu.memory_space<vmem>>, vector<1x2048xf32>
    %c1 = arith.constant 1 : index
    %c0_1 = arith.constant 0 : index
    %1 = vector.load %arg2[%c1, %c0_1] : memref<2x2048xf32, #tpu.memory_space<vmem>>, vector<1x2048xf32>
    %cst = arith.constant 0.000000e+00 : f32
    %2 = vector.broadcast %cst : f32 to vector<1x2048xf32>
    %c0_2 = arith.constant 0 : index
    %3 = memref.load %arg1[%c0_2] : memref<17xf32, #tpu.memory_space<smem>>
    %4 = vector.broadcast %3 : f32 to vector<1x2048xf32>
    %5 = arith.mulf %4, %0 : vector<1x2048xf32>
    %c4 = arith.constant 4 : index
    %6 = memref.load %arg1[%c4] : memref<17xf32, #tpu.memory_space<smem>>
    %7 = vector.broadcast %6 : f32 to vector<1x2048xf32>
    %8 = arith.mulf %7, %1 : vector<1x2048xf32>
    %9 = arith.addf %5, %8 : vector<1x2048xf32>
    %c8 = arith.constant 8 : index
    %10 = memref.load %arg1[%c8] : memref<17xf32, #tpu.memory_space<smem>>
    %11 = vector.broadcast %10 : f32 to vector<1x2048xf32>
    %12 = arith.addf %9, %11 : vector<1x2048xf32>
    %cst_3 = arith.constant 0.000000e+00 : f32
    %13 = vector.broadcast %cst_3 : f32 to vector<1x2048xf32>
    %14 = arith.maximumf %12, %13 : vector<1x2048xf32>
    %c12 = arith.constant 12 : index
    %15 = memref.load %arg1[%c12] : memref<17xf32, #tpu.memory_space<smem>>
    %16 = vector.broadcast %15 : f32 to vector<1x2048xf32>
    %17 = arith.mulf %16, %14 : vector<1x2048xf32>
    %18 = arith.addf %2, %17 : vector<1x2048xf32>
    %c1_4 = arith.constant 1 : index
    %19 = memref.load %arg1[%c1_4] : memref<17xf32, #tpu.memory_space<smem>>
    %20 = vector.broadcast %19 : f32 to vector<1x2048xf32>
    %21 = arith.mulf %20, %0 : vector<1x2048xf32>
    %c5 = arith.constant 5 : index
    %22 = memref.load %arg1[%c5] : memref<17xf32, #tpu.memory_space<smem>>
    %23 = vector.broadcast %22 : f32 to vector<1x2048xf32>
    %24 = arith.mulf %23, %1 : vector<1x2048xf32>
    %25 = arith.addf %21, %24 : vector<1x2048xf32>
    %c9 = arith.constant 9 : index
    %26 = memref.load %arg1[%c9] : memref<17xf32, #tpu.memory_space<smem>>
    %27 = vector.broadcast %26 : f32 to vector<1x2048xf32>
    %28 = arith.addf %25, %27 : vector<1x2048xf32>
    %cst_5 = arith.constant 0.000000e+00 : f32
    %29 = vector.broadcast %cst_5 : f32 to vector<1x2048xf32>
    %30 = arith.maximumf %28, %29 : vector<1x2048xf32>
    %c13 = arith.constant 13 : index
    %31 = memref.load %arg1[%c13] : memref<17xf32, #tpu.memory_space<smem>>
    %32 = vector.broadcast %31 : f32 to vector<1x2048xf32>
    %33 = arith.mulf %32, %30 : vector<1x2048xf32>
    %34 = arith.addf %18, %33 : vector<1x2048xf32>
    %c2 = arith.constant 2 : index
    %35 = memref.load %arg1[%c2] : memref<17xf32, #tpu.memory_space<smem>>
    %36 = vector.broadcast %35 : f32 to vector<1x2048xf32>
    %37 = arith.mulf %36, %0 : vector<1x2048xf32>
    %c6 = arith.constant 6 : index
    %38 = memref.load %arg1[%c6] : memref<17xf32, #tpu.memory_space<smem>>
    %39 = vector.broadcast %38 : f32 to vector<1x2048xf32>
    %40 = arith.mulf %39, %1 : vector<1x2048xf32>
    %41 = arith.addf %37, %40 : vector<1x2048xf32>
    %c10 = arith.constant 10 : index
    %42 = memref.load %arg1[%c10] : memref<17xf32, #tpu.memory_space<smem>>
    %43 = vector.broadcast %42 : f32 to vector<1x2048xf32>
    %44 = arith.addf %41, %43 : vector<1x2048xf32>
    %cst_6 = arith.constant 0.000000e+00 : f32
    %45 = vector.broadcast %cst_6 : f32 to vector<1x2048xf32>
    %46 = arith.maximumf %44, %45 : vector<1x2048xf32>
    %c14 = arith.constant 14 : index
    %47 = memref.load %arg1[%c14] : memref<17xf32, #tpu.memory_space<smem>>
    %48 = vector.broadcast %47 : f32 to vector<1x2048xf32>
    %49 = arith.mulf %48, %46 : vector<1x2048xf32>
    %50 = arith.addf %34, %49 : vector<1x2048xf32>
    %c3 = arith.constant 3 : index
    %51 = memref.load %arg1[%c3] : memref<17xf32, #tpu.memory_space<smem>>
    %52 = vector.broadcast %51 : f32 to vector<1x2048xf32>
    %53 = arith.mulf %52, %0 : vector<1x2048xf32>
    %c7 = arith.constant 7 : index
    %54 = memref.load %arg1[%c7] : memref<17xf32, #tpu.memory_space<smem>>
    %55 = vector.broadcast %54 : f32 to vector<1x2048xf32>
    %56 = arith.mulf %55, %1 : vector<1x2048xf32>
    %57 = arith.addf %53, %56 : vector<1x2048xf32>
    %c11 = arith.constant 11 : index
    %58 = memref.load %arg1[%c11] : memref<17xf32, #tpu.memory_space<smem>>
    %59 = vector.broadcast %58 : f32 to vector<1x2048xf32>
    %60 = arith.addf %57, %59 : vector<1x2048xf32>
    %cst_7 = arith.constant 0.000000e+00 : f32
    %61 = vector.broadcast %cst_7 : f32 to vector<1x2048xf32>
    %62 = arith.maximumf %60, %61 : vector<1x2048xf32>
    %c15 = arith.constant 15 : index
    %63 = memref.load %arg1[%c15] : memref<17xf32, #tpu.memory_space<smem>>
    %64 = vector.broadcast %63 : f32 to vector<1x2048xf32>
    %65 = arith.mulf %64, %62 : vector<1x2048xf32>
    %66 = arith.addf %50, %65 : vector<1x2048xf32>
    %c16 = arith.constant 16 : index
    %67 = memref.load %arg1[%c16] : memref<17xf32, #tpu.memory_space<smem>>
    %68 = vector.broadcast %67 : f32 to vector<1x2048xf32>
    %69 = arith.addf %66, %68 : vector<1x2048xf32>
    %70 = arith.negf %69 : vector<1x2048xf32>
    %71 = math.exp %70 : vector<1x2048xf32>
    %cst_8 = arith.constant 1.000000e+00 : f32
    %72 = vector.broadcast %cst_8 : f32 to vector<1x2048xf32>
    %73 = arith.addf %72, %71 : vector<1x2048xf32>
    %74 = arith.divf %72, %73 : vector<1x2048xf32>
    %c0_9 = arith.constant 0 : index
    %c0_10 = arith.constant 0 : index
    %75 = vector.load %arg3[%c0_9, %c0_10] : memref<1x2048xf32, #tpu.memory_space<vmem>>, vector<1x2048xf32>
    tpu.vector_store %arg3[%c0_9, %c0_10], %74 {strides = array<i32>} : memref<1x2048xf32, #tpu.memory_space<vmem>>, vector<1x2048xf32>,
    return
  }
  func.func @transform_0(%arg0: i32, %arg1: memref<17xf32, #tpu.memory_space<smem>>) -> (i32, i32) {
    %c0_i32 = arith.constant 0 : i32
    %c0_i32_0 = arith.constant 0 : i32
    return %c0_i32, %arg0 : i32, i32
  }
  func.func @transform_1(%arg0: i32, %arg1: memref<17xf32, #tpu.memory_space<smem>>) -> (i32, i32) {
    %c0_i32 = arith.constant 0 : i32
    %c0_i32_0 = arith.constant 0 : i32
    return %c0_i32, %arg0 : i32, i32
  }
}

</mosaic_0001>

<llo_original>
// kernel: tpu_custom_call.1
$region0: #{tpu_custom_call.1}
  #allocation0 [shape = 'u32[]', space=smem, size = 0x4, offset = 0x4, fixed_abs, tag = 'smem constant byte address 0x4 - core index']
  #allocation1 [shape = 'u32[72,128]{1,0:T(1,128)}', space=vmem, size = 0x9000, scoped, tag = 'internal scratch']
  #allocation2 [shape = 's32[1]{0}', space=sflag, size = 0x4, scoped, tag = 'scoped memory for tpu_custom_call.1']
  #allocation3 [shape = 'u8[512]{0}', space=smem, size = 0x200, scoped, tag = 'prefetched SMEM operand 0']
  %s0 = inlined_call_operand.hbm [shape: f32[17], index: 0, kind: input, shape index: {}]
  %s1 = inlined_call_operand.hbm [shape: f32[2,2048], index: 1, kind: input, shape index: {}]
  %s2 = inlined_call_operand.hbm [shape: f32[1,2048], index: 2, kind: output, shape index: {}]
  %s3 = sld [smem:[#allocation0]]
  $region18: #{tpu_custom_call.1} parent=0
    _
  %s5 = ssub.s32 1, %s3
  %s6 = scalar_select 0, %s5, %s3
  %s8 = sshll.u32 %s0, 4
  %s9 = int_to_ptr.hbm [resolvable:$true] %s8
  %11 = dma.hbm_to_smem %s9, 16, [#allocation3], [#allocation2]
  %13 = dma.done [#allocation2], 16
  %14 = sfence
  $region1: #{tpu_custom_call.1} parent=0
    #allocation4 [shape = 'u8[16384]{0}', space=vmem, size = 0x4000, scoped, tag = 'input window, operand 1, single buffered']
    #allocation5 [shape = 's32[1]{0}', space=sflag, size = 0x4, scoped, tag = 'scoped memory for tpu_custom_call.1']
    #allocation6 [shape = 's32[1]{0}', space=sflag, size = 0x4, scoped, tag = 'scoped memory for tpu_custom_call.1']
    #allocation7 [shape = 'u8[8192]{0}', space=vmem, size = 0x2000, scoped, tag = 'output window, operand 0, single buffered']
    %15 = vsyncpa [#allocation5], 0
    %16 = vsyncpa [#allocation6], 0
    // Predicated region
    $region2: #{tpu_custom_call.1} parent=1 // pred_check
      _
    $region3: #{tpu_custom_call.1} parent=1 // pred_check_branch
      %18 = sbr.rel (0) target = $region5
    $region4: #{tpu_custom_call.1} parent=1 // pred_region
      %20 = vsyncadd [#allocation5], 0
      %s22 = sshll.u32 %s1, 4
      %s23 = int_to_ptr.hbm [resolvable:$true] %s22
      %s24 = sshll.u32 [#allocation4], 4
      %s25 = int_to_ptr.vmem [resolvable:$true] %s24
      %27 = dma.hbm_to_vmem [thread:$0]  %s23, 512, %s25, [#allocation5]
    $region5: #{tpu_custom_call.1} parent=1 // pred_fallthru
      _
    // Predicated region
    $region6: #{tpu_custom_call.1} parent=1 // pred_check
      _
    $region7: #{tpu_custom_call.1} parent=1 // pred_check_branch
      %29 = sbr.rel (0) target = $region9
    $region8: #{tpu_custom_call.1} parent=1 // pred_region
      %31 = dma.done [#allocation5], 512
    $region9: #{tpu_custom_call.1} parent=1 // pred_fallthru
      _
    %v32 = vld [vmem:[#allocation4] ss:$2 sm:$0xff]
    %s33 = scalar_lea.vmem [#allocation4], 16
    %v34 = vld [vmem:[%s33] ss:$2 sm:$0xff]
    %s35 = scalar_lea.vmem [#allocation4], 1
    %v36 = vld [vmem:[%s35] ss:$2 sm:$0xff]
    %s37 = scalar_lea.vmem [#allocation4], 17
    %v38 = vld [vmem:[%s37] ss:$2 sm:$0xff]
    %s39 = sld [smem:[#allocation3]]
    %v40 = vstv %s39
    %v41 = vmul.f32 %v40, %v32
    %v42 = vmul.f32 %v40, %v34
    %s43 = sld [smem:[#allocation3 + $0x4]]
    %v44 = vstv %s43
    %v45 = vmul.f32 %v44, %v36
    %v46 = vmul.f32 %v44, %v38
    %v47 = vadd.f32 %v41, %v45
    %v48 = vadd.f32 %v42, %v46
    %s49 = sld [smem:[#allocation3 + $0x8]]
    %v50 = vstv %s49
    %v51 = vadd.f32 %v47, %v50
    %v52 = vadd.f32 %v48, %v50
    %v53 = vmax.f32 %v51, 0.0
    %v54 = vmax.f32 %v52, 0.0
    %s55 = sld [smem:[#allocation3 + $0xc]]
    %v56 = vstv %s55
    %v57 = vmul.f32 %v56, %v53
    %v58 = vmul.f32 %v56, %v54
    %v59 = vadd.f32 %v57, 0.0
    %v60 = vadd.f32 %v58, 0.0
    %s61 = sld [smem:[#allocation3 + $0x1]]
    %v62 = vstv %s61
    %v63 = vmul.f32 %v62, %v32
    %v64 = vmul.f32 %v62, %v34
    %s65 = sld [smem:[#allocation3 + $0x5]]
    %v66 = vstv %s65
    %v67 = vmul.f32 %v66, %v36
    %v68 = vmul.f32 %v66, %v38
    %v69 = vadd.f32 %v63, %v67
    %v70 = vadd.f32 %v64, %v68
    %s71 = sld [smem:[#allocation3 + $0x9]]
    %v72 = vstv %s71
    %v73 = vadd.f32 %v69, %v72
    %v74 = vadd.f32 %v70, %v72
    %v75 = vmax.f32 %v73, 0.0
    %v76 = vmax.f32 %v74, 0.0
    %s77 = sld [smem:[#allocation3 + $0xd]]
    %v78 = vstv %s77
    %v79 = vmul.f32 %v78, %v75
    %v80 = vmul.f32 %v78, %v76
    %v81 = vadd.f32 %v59, %v79
    %v82 = vadd.f32 %v60, %v80
    %s83 = sld [smem:[#allocation3 + $0x2]]
    %v84 = vstv %s83
    %v85 = vmul.f32 %v84, %v32
    %v86 = vmul.f32 %v84, %v34
    %s87 = sld [smem:[#allocation3 + $0x6]]
    %v88 = vstv %s87
    %v89 = vmul.f32 %v88, %v36
    %v90 = vmul.f32 %v88, %v38
    %v91 = vadd.f32 %v85, %v89
    %v92 = vadd.f32 %v86, %v90
    %s93 = sld [smem:[#allocation3 + $0xa]]
    %v94 = vstv %s93
    %v95 = vadd.f32 %v91, %v94
    %v96 = vadd.f32 %v92, %v94
    %v97 = vmax.f32 %v95, 0.0
    %v98 = vmax.f32 %v96, 0.0
    %s99 = sld [smem:[#allocation3 + $0xe]]
    %v100 = vstv %s99
    %v101 = vmul.f32 %v100, %v97
    %v102 = vmul.f32 %v100, %v98
    %v103 = vadd.f32 %v81, %v101
    %v104 = vadd.f32 %v82, %v102
    %s105 = sld [smem:[#allocation3 + $0x3]]
    %v106 = vstv %s105
    %v107 = vmul.f32 %v106, %v32
    %v108 = vmul.f32 %v106, %v34
    %s109 = sld [smem:[#allocation3 + $0x7]]
    %v110 = vstv %s109
    %v111 = vmul.f32 %v110, %v36
    %v112 = vmul.f32 %v110, %v38
    %v113 = vadd.f32 %v107, %v111
    %v114 = vadd.f32 %v108, %v112
    %s115 = sld [smem:[#allocation3 + $0xb]]
    %v116 = vstv %s115
    %v117 = vadd.f32 %v113, %v116
    %v118 = vadd.f32 %v114, %v116
    %v119 = vmax.f32 %v117, 0.0
    %v120 = vmax.f32 %v118, 0.0
    %s121 = sld [smem:[#allocation3 + $0xf]]
    %v122 = vstv %s121
    %v123 = vmul.f32 %v122, %v119
    %v124 = vmul.f32 %v122, %v120
    %v125 = vadd.f32 %v103, %v123
    %v126 = vadd.f32 %v104, %v124
    %s127 = sld [smem:[#allocation3 + $0x10]]
    %v128 = vstv %s127
    %v129 = vadd.f32 %v125, %v128
    %v130 = vadd.f32 %v126, %v128
    %v131 = vxor.u32 %v129, 2147483648
    %v132 = vxor.u32 %v130, 2147483648
    %v133 = vmul.f32 %v131, 1.442695
    %v134 = vpow.pop %v133
    %v135 = vmul.f32 %v132, 1.442695
    %v136 = vpow.pop %v135
    %v137 = vadd.f32 %v134, 1.0
    %v138 = vadd.f32 %v136, 1.0
    %v139 = vrcp.pop %v137
    %v140 = vmul.f32 %v137, %v139
    %v141 = vsub.f32 1.0, %v140
    %v142 = vmul.f32 %v139, %v141
    %v143 = vadd.f32 %v139, %v142
    %vm144 = vweird.f32 %v137
    %vm145 = vweird.f32 %v139
    %vm146 = vmor %vm144, %vm145
    %v147 = vsel %vm146, %v139, %v143
    %v148 = vand.u32 2147483647, %v137
    %vm149 = vcmp.eq.f32.partialorder %v148, 8.507059e+37
    %v150 = vand.u32 %v137, 2147483648
    %v151 = vor.u32 1.1754944e-38, %v150
    %v152 = vsel %vm149, %v151, %v147
    %v153 = vmul.f32 1.0, %v152
    %v154 = vrcp.pop %v138
    %v155 = vmul.f32 %v138, %v154
    %v156 = vsub.f32 1.0, %v155
    %v157 = vmul.f32 %v154, %v156
    %v158 = vadd.f32 %v154, %v157
    %vm159 = vweird.f32 %v138
    %vm160 = vweird.f32 %v154
    %vm161 = vmor %vm159, %vm160
    %v162 = vsel %vm161, %v154, %v158
    %v163 = vand.u32 2147483647, %v138
    %vm164 = vcmp.eq.f32.partialorder %v163, 8.507059e+37
    %v165 = vand.u32 %v138, 2147483648
    %v166 = vor.u32 1.1754944e-38, %v165
    %v167 = vsel %vm164, %v166, %v162
    %v168 = vmul.f32 1.0, %v167
    %169 = vst [vmem:[#allocation7] sm:$0xff] %v153
    %170 = vst [vmem:[#allocation7 + $0x8] sm:$0xff] %v168
    // Predicated region
    $region10: #{tpu_custom_call.1} parent=1 // pred_check
      _
    $region11: #{tpu_custom_call.1} parent=1 // pred_check_branch
      %172 = sbr.rel (0) target = $region13
    $region12: #{tpu_custom_call.1} parent=1 // pred_region
      %174 = vsyncadd [#allocation6], 0
      %s176 = sshll.u32 [#allocation7], 4
      %s177 = int_to_ptr.vmem [resolvable:$true] %s176
      %s178 = sshll.u32 %s2, 4
      %s179 = int_to_ptr.hbm [resolvable:$true] %s178
      %181 = dma.vmem_to_hbm [thread:$0]  %s177, 256, %s179, [#allocation6]
    $region13: #{tpu_custom_call.1} parent=1 // pred_fallthru
      _
    // Predicated region
    $region14: #{tpu_custom_call.1} parent=1 // pred_check
      _
    $region15: #{tpu_custom_call.1} parent=1 // pred_check_branch
      %183 = sbr.rel (0) target = $region17
    $region16: #{tpu_custom_call.1} parent=1 // pred_region
      %185 = dma.done [#allocation6], 256
    $region17: #{tpu_custom_call.1} parent=1 // pred_fallthru
      _
    %186 = vsyncpa [#allocation5], 1
    %187 = vsyncpa [#allocation6], 1

</llo_original>
